<compile_context>
chip_gen: v7x
topology: tpu7x:2x2x1
jax: 0.10.0
libtpu: 0.0.40
codegen_flags: <defaults>
</compile_context>

<pallas_src>
import functools

import jax
import jax.numpy as jnp
from jax.experimental import pallas as pl
from jax.experimental.pallas import tpu as pltpu

IN_F = 5 * 9   # 45
H1 = 20
H2 = 10
OUT_F = 5


def mlp_kernel(x_ref, w1_ref, b1t_ref, w2t_ref, b2t_ref, w3t_ref, b3t_ref, o_ref):
    # x_ref: (TILE_B, 45) f32, one batch tile per grid step.
    # Weights/biases are VMEM-resident across the grid (constant index_maps).
    # b/w refs with a "t" suffix are pre-transposed in the wrapper:
    #   b1t (H1,1), w2t (H2,H1), b2t (H2,1), w3t (OUT_F,H2), b3t (OUT_F,1).
    x = x_ref[...]

    # fc1 in batch-major orientation (x stays as streamed from HBM).
    a1 = jnp.dot(x, w1_ref[...], preferred_element_type=jnp.float32)  # (TILE_B, H1)

    # Single XLU transpose; everything downstream is lane-dense (batch on the
    # 128-lane axis), so bias/ReLU/softmax touch ~16-25x fewer vregs.
    a1t = a1.T                                                        # (H1, TILE_B)
    h1t = jnp.maximum(a1t + b1t_ref[...], 0.0)

    h2t = jnp.maximum(
        jnp.dot(w2t_ref[...], h1t, preferred_element_type=jnp.float32)
        + b2t_ref[...], 0.0)                                          # (H2, TILE_B)

    logits_t = (jnp.dot(w3t_ref[...], h2t, preferred_element_type=jnp.float32)
                + b3t_ref[...])                                       # (OUT_F, TILE_B)

    # Numerically stable softmax over the feature axis (PyTorch dim=1), which
    # is axis 0 (sublanes) in this transposed orientation.  Exact divide.
    m = jnp.max(logits_t, axis=0, keepdims=True)
    e = jnp.exp(logits_t - m)
    s = jnp.sum(e, axis=0, keepdims=True)
    o_ref[...] = e / s                                                # (OUT_F, TILE_B)


def _round_up(n, m):
    return ((n + m - 1) // m) * m


def _ceil_div(a, b):
    return -(-a // b)


@functools.partial(jax.jit, static_argnames=("tile_b",))
def net_forward(x, params, tile_b=8192):
    """x: (B, 5, 9) float32 -> (B, 5) float32 softmax probabilities."""
    w1, b1, w2, b2, w3, b3 = params
    B = x.shape[0]

    # torch.flatten(x, 1); a contiguous reshape is free in XLA.  Stream f32
    # directly -- no wrapper-side dtype cast (it would double HBM traffic).
    x_flat = x.reshape(B, IN_F)

    # Balanced, 128-aligned batch tiles:
    #  - the transposed output block's last (lane) dim is tile_b_eff, so it
    #    must be a multiple of 128;
    #  - balancing (ceil(B / n_tiles)) avoids padding by almost a full tile
    #    for unlucky B (e.g. B=8200 with tile 8192).
    n_tiles = max(1, _ceil_div(B, tile_b))
    tile_b_eff = _round_up(_ceil_div(B, n_tiles), 128)
    padded_b = n_tiles * tile_b_eff
    if padded_b != B:
        # Padded rows are zeros -> softmax(bias-only logits) in padded output
        # columns; sliced off below.  Benign by construction.
        x_flat = jnp.pad(x_flat, ((0, padded_b - B), (0, 0)))
    grid = (n_tiles,)

    # Tiny weight reshapes/transposes for the lane-dense orientation
    # (negligible: a few hundred bytes).
    b1t = jnp.reshape(b1, (H1, 1))
    w2t = w2.T
    b2t = jnp.reshape(b2, (H2, 1))
    w3t = w3.T
    b3t = jnp.reshape(b3, (OUT_F, 1))

    resident = lambda i: (0, 0)  # weights/biases: same block every grid step

    cost = pl.CostEstimate(
        flops=2 * padded_b * (IN_F * H1 + H1 * H2 + H2 * OUT_F),
        transcendentals=padded_b * OUT_F,
        bytes_accessed=(
            padded_b * IN_F * 4          # x (f32, streamed)
            + padded_b * OUT_F * 4       # output (f32, lane-dense transposed)
            + (IN_F * H1 + H1 + H1 * H2 + H2 + H2 * OUT_F + OUT_F) * 4
        ),
    )

    out_t = pl.pallas_call(
        mlp_kernel,
        out_shape=jax.ShapeDtypeStruct((OUT_F, padded_b), jnp.float32),
        grid=grid,
        in_specs=[
            pl.BlockSpec((tile_b_eff, IN_F), lambda i: (i, 0)),
            pl.BlockSpec((IN_F, H1), resident),
            pl.BlockSpec((H1, 1), resident),
            pl.BlockSpec((H2, H1), resident),
            pl.BlockSpec((H2, 1), resident),
            pl.BlockSpec((OUT_F, H2), resident),
            pl.BlockSpec((OUT_F, 1), resident),
        ],
        out_specs=pl.BlockSpec((OUT_F, tile_b_eff), lambda i: (0, i)),
        compiler_params=pltpu.CompilerParams(
            dimension_semantics=("parallel",),
            vmem_limit_bytes=32 * 1024 * 1024,
        ),
        cost_estimate=cost,
    )(x_flat, w1, b1t, w2t, b2t, w3t, b3t)

    # Only the tiny (OUT_F, B) result flips back to batch-major.
    return out_t[:, :B].T


def init_params(key):
    """Deterministic init matching nn.Linear shapes (stored as (in, out))."""
    keys = jax.random.split(key, 6)

    def linear(kw, kb, fan_in, fan_out):
        bound = 1.0 / jnp.sqrt(float(fan_in))  # PyTorch default uniform bound
        w = jax.random.uniform(kw, (fan_in, fan_out), jnp.float32, -bound, bound)
        b = jax.random.uniform(kb, (1, fan_out), jnp.float32, -bound, bound)
        return w, b

    w1, b1 = linear(keys[0], keys[1], IN_F, H1)
    w2, b2 = linear(keys[2], keys[3], H1, H2)
    w3, b3 = linear(keys[4], keys[5], H2, OUT_F)
    return (w1, b1, w2, b2, w3, b3)


def reference_forward(x, params):
    """Pure-JAX f32 reference matching the PyTorch module semantics."""
    w1, b1, w2, b2, w3, b3 = params
    xf = x.reshape(x.shape[0], -1)
    h1 = jnp.maximum(xf @ w1 + b1, 0.0)
    h2 = jnp.maximum(h1 @ w2 + b2, 0.0)
    return jax.nn.softmax(h2 @ w3 + b3, axis=-1)


if __name__ == "__main__":
    key = jax.random.PRNGKey(0)
    k_x, k_x2, k_p = jax.random.split(key, 3)
    params = init_params(k_p)

    # Small shape matching the module spec: (batch=2, 5, 9).
    B = 2
    x = jax.random.normal(k_x, (B, 5, 9), dtype=jnp.float32)
    out = jax.block_until_ready(net_forward(x, params))
    assert out.shape == (B, OUT_F)
    assert jnp.allclose(jnp.sum(out, axis=1), 1.0, atol=1e-5)
    assert jnp.allclose(out, reference_forward(x, params), atol=1e-2)

    # Larger batch exercising the tiled grid (multiple blocks + padding).
    B2 = 300
    x2 = jax.random.normal(k_x2, (B2, 5, 9), dtype=jnp.float32)
    out2 = jax.block_until_ready(net_forward(x2, params, tile_b=128))
    assert out2.shape == (B2, OUT_F)
    assert jnp.allclose(jnp.sum(out2, axis=1), 1.0, atol=1e-5)
    assert jnp.allclose(out2, reference_forward(x2, params), atol=1e-2)

    print("KERNEL_OK")
</pallas_src>

<mosaic_0001>
module attributes {stable_mosaic.version = 11 : i64} {
  func.func @mlp_kernel(%arg0: i32, %arg1: memref<128x45xf32, #tpu.memory_space<vmem>>, %arg2: memref<45x20xf32, #tpu.memory_space<vmem>>, %arg3: memref<20x1xf32, #tpu.memory_space<vmem>>, %arg4: memref<10x20xf32, #tpu.memory_space<vmem>>, %arg5: memref<10x1xf32, #tpu.memory_space<vmem>>, %arg6: memref<5x10xf32, #tpu.memory_space<vmem>>, %arg7: memref<5x1xf32, #tpu.memory_space<vmem>>, %arg8: memref<5x128xf32, #tpu.memory_space<vmem>>) attributes {dimension_semantics = [#tpu.dimension_semantics<parallel>], iteration_bounds = array<i64: 1>, scalar_prefetch = 0 : i64, scratch_operands = 0 : i64, tpu.core_type = #tpu.core_type<tc>, window_params = [{transform_indices = @transform_0, window_bounds = array<i64: 128, 45>}, {pipeline_mode = #tpu.pipeline_mode<synchronous>, transform_indices = @transform_1, window_bounds = array<i64: 45, 20>}, {pipeline_mode = #tpu.pipeline_mode<synchronous>, transform_indices = @transform_2, window_bounds = array<i64: 20, 1>}, {pipeline_mode = #tpu.pipeline_mode<synchronous>, transform_indices = @transform_3, window_bounds = array<i64: 10, 20>}, {pipeline_mode = #tpu.pipeline_mode<synchronous>, transform_indices = @transform_4, window_bounds = array<i64: 10, 1>}, {pipeline_mode = #tpu.pipeline_mode<synchronous>, transform_indices = @transform_5, window_bounds = array<i64: 5, 10>}, {pipeline_mode = #tpu.pipeline_mode<synchronous>, transform_indices = @transform_6, window_bounds = array<i64: 5, 1>}, {transform_indices = @transform_7, window_bounds = array<i64: 5, 128>}]} {
    %c0 = arith.constant 0 : index
    %c0_0 = arith.constant 0 : index
    %0 = vector.load %arg1[%c0, %c0_0] : memref<128x45xf32, #tpu.memory_space<vmem>>, vector<128x45xf32>
    %c0_1 = arith.constant 0 : index
    %c0_2 = arith.constant 0 : index
    %1 = vector.load %arg2[%c0_1, %c0_2] : memref<45x20xf32, #tpu.memory_space<vmem>>, vector<45x20xf32>
    %cst = arith.constant dense<0.000000e+00> : vector<128x20xf32>
    %2 = tpu.matmul %0, %1, %cst {dimension_numbers = #tpu.dot_dimension_numbers<[1], [0], [0], [1], [0, 0, 1, 1], [], []>} : vector<128x45xf32>, vector<45x20xf32>, vector<128x20xf32> -> vector<128x20xf32>
    %3 = tpu.transpose %2, [1, 0] : vector<128x20xf32> -> vector<20x128xf32>
    %c0_3 = arith.constant 0 : index
    %c0_4 = arith.constant 0 : index
    %4 = vector.load %arg3[%c0_3, %c0_4] : memref<20x1xf32, #tpu.memory_space<vmem>>, vector<20x1xf32>
    %5 = vector.broadcast %4 : vector<20x1xf32> to vector<20x128xf32>
    %6 = arith.addf %3, %5 : vector<20x128xf32>
    %cst_5 = arith.constant 0.000000e+00 : f32
    %7 = vector.broadcast %cst_5 : f32 to vector<20x128xf32>
    %8 = arith.maximumf %6, %7 : vector<20x128xf32>
    %c0_6 = arith.constant 0 : index
    %c0_7 = arith.constant 0 : index
    %9 = vector.load %arg4[%c0_6, %c0_7] : memref<10x20xf32, #tpu.memory_space<vmem>>, vector<10x20xf32>
    %cst_8 = arith.constant dense<0.000000e+00> : vector<10x128xf32>
    %10 = tpu.matmul %9, %8, %cst_8 {dimension_numbers = #tpu.dot_dimension_numbers<[1], [0], [0], [1], [0, 0, 1, 1], [], []>} : vector<10x20xf32>, vector<20x128xf32>, vector<10x128xf32> -> vector<10x128xf32>
    %c0_9 = arith.constant 0 : index
    %c0_10 = arith.constant 0 : index
    %11 = vector.load %arg5[%c0_9, %c0_10] : memref<10x1xf32, #tpu.memory_space<vmem>>, vector<10x1xf32>
    %12 = vector.broadcast %11 : vector<10x1xf32> to vector<10x128xf32>
    %13 = arith.addf %10, %12 : vector<10x128xf32>
    %cst_11 = arith.constant 0.000000e+00 : f32
    %14 = vector.broadcast %cst_11 : f32 to vector<10x128xf32>
    %15 = arith.maximumf %13, %14 : vector<10x128xf32>
    %c0_12 = arith.constant 0 : index
    %c0_13 = arith.constant 0 : index
    %16 = vector.load %arg6[%c0_12, %c0_13] : memref<5x10xf32, #tpu.memory_space<vmem>>, vector<5x10xf32>
    %cst_14 = arith.constant dense<0.000000e+00> : vector<5x128xf32>
    %17 = tpu.matmul %16, %15, %cst_14 {dimension_numbers = #tpu.dot_dimension_numbers<[1], [0], [0], [1], [0, 0, 1, 1], [], []>} : vector<5x10xf32>, vector<10x128xf32>, vector<5x128xf32> -> vector<5x128xf32>
    %c0_15 = arith.constant 0 : index
    %c0_16 = arith.constant 0 : index
    %18 = vector.load %arg7[%c0_15, %c0_16] : memref<5x1xf32, #tpu.memory_space<vmem>>, vector<5x1xf32>
    %19 = vector.broadcast %18 : vector<5x1xf32> to vector<5x128xf32>
    %20 = arith.addf %17, %19 : vector<5x128xf32>
    %cst_17 = arith.constant dense<0xFF800000> : vector<128xf32>
    %21 = vector.multi_reduction <maximumf>, %20, %cst_17 [0] : vector<5x128xf32> to vector<128xf32>
    %22 = vector.shape_cast %21 : vector<128xf32> to vector<1x128xf32>
    %23 = vector.broadcast %22 : vector<1x128xf32> to vector<5x128xf32>
    %24 = arith.subf %20, %23 : vector<5x128xf32>
    %25 = math.exp %24 : vector<5x128xf32>
    %cst_18 = arith.constant dense<0.000000e+00> : vector<128xf32>
    %26 = vector.multi_reduction <add>, %25, %cst_18 [0] : vector<5x128xf32> to vector<128xf32>
    %27 = vector.shape_cast %26 : vector<128xf32> to vector<1x128xf32>
    %28 = vector.broadcast %27 : vector<1x128xf32> to vector<5x128xf32>
    %29 = arith.divf %25, %28 : vector<5x128xf32>
    %c0_19 = arith.constant 0 : index
    %c0_20 = arith.constant 0 : index
    %30 = vector.load %arg8[%c0_19, %c0_20] : memref<5x128xf32, #tpu.memory_space<vmem>>, vector<5x128xf32>
    tpu.vector_store %arg8[%c0_19, %c0_20], %29 {strides = array<i32>} : memref<5x128xf32, #tpu.memory_space<vmem>>, vector<5x128xf32>,
    return
  }
  func.func @transform_0(%arg0: i32) -> (i32, i32) {
    %c0_i32 = arith.constant 0 : i32
    %c0_i32_0 = arith.constant 0 : i32
    return %arg0, %c0_i32 : i32, i32
  }
  func.func @transform_1(%arg0: i32) -> (i32, i32) {
    %c0_i32 = arith.constant 0 : i32
    %c0_i32_0 = arith.constant 0 : i32
    %c0_i32_1 = arith.constant 0 : i32
    return %c0_i32, %c0_i32_0 : i32, i32
  }
  func.func @transform_2(%arg0: i32) -> (i32, i32) {
    %c0_i32 = arith.constant 0 : i32
    %c0_i32_0 = arith.constant 0 : i32
    %c0_i32_1 = arith.constant 0 : i32
    return %c0_i32, %c0_i32_0 : i32, i32
  }
  func.func @transform_3(%arg0: i32) -> (i32, i32) {
    %c0_i32 = arith.constant 0 : i32
    %c0_i32_0 = arith.constant 0 : i32
    %c0_i32_1 = arith.constant 0 : i32
    return %c0_i32, %c0_i32_0 : i32, i32
  }
  func.func @transform_4(%arg0: i32) -> (i32, i32) {
    %c0_i32 = arith.constant 0 : i32
    %c0_i32_0 = arith.constant 0 : i32
    %c0_i32_1 = arith.constant 0 : i32
    return %c0_i32, %c0_i32_0 : i32, i32
  }
  func.func @transform_5(%arg0: i32) -> (i32, i32) {
    %c0_i32 = arith.constant 0 : i32
    %c0_i32_0 = arith.constant 0 : i32
    %c0_i32_1 = arith.constant 0 : i32
    return %c0_i32, %c0_i32_0 : i32, i32
  }
  func.func @transform_6(%arg0: i32) -> (i32, i32) {
    %c0_i32 = arith.constant 0 : i32
    %c0_i32_0 = arith.constant 0 : i32
    %c0_i32_1 = arith.constant 0 : i32
    return %c0_i32, %c0_i32_0 : i32, i32
  }
  func.func @transform_7(%arg0: i32) -> (i32, i32) {
    %c0_i32 = arith.constant 0 : i32
    %c0_i32_0 = arith.constant 0 : i32
    return %c0_i32, %arg0 : i32, i32
  }
}

</mosaic_0001>

<llo_original>
// kernel: net_forward.1
$region0: #{net_forward.1}
  #allocation0 [shape = 'u32[]', space=smem, size = 0x4, offset = 0x4, fixed_abs, tag = 'smem constant byte address 0x4 - core index']
  #allocation1 [shape = 'u32[144,128]{1,0:T(1,128)}', space=vmem, size = 0x12000, scoped, tag = 'internal scratch']
  %s0 = inlined_call_operand.vmem [shape: f32[128,45], index: 0, kind: input, shape index: {}]
  %s1 = inlined_call_operand.vmem [shape: f32[45,20], index: 1, kind: input, shape index: {}]
  %s2 = inlined_call_operand.vmem [shape: f32[20,1], index: 2, kind: input, shape index: {}]
  %s3 = inlined_call_operand.vmem [shape: f32[10,20], index: 3, kind: input, shape index: {}]
  %s4 = inlined_call_operand.vmem [shape: f32[10,1], index: 4, kind: input, shape index: {}]
  %s5 = inlined_call_operand.vmem [shape: f32[5,10], index: 5, kind: input, shape index: {}]
  %s6 = inlined_call_operand.vmem [shape: f32[5,1], index: 6, kind: input, shape index: {}]
  %s7 = inlined_call_operand.vmem [shape: f32[5,128], index: 7, kind: output, shape index: {}]
  %s8 = sld [smem:[#allocation0]]
  $region38: #{net_forward.1} parent=0
    _
  %s10 = ssub.s32 1, %s8
  %s11 = scalar_select 0, %s10, %s8
  // Predicated region
  $region2: #{net_forward.1} parent=0 // pred_check
    _
  $region3: #{net_forward.1} parent=0 // pred_check_branch
    %13 = sbr.rel (0) target = $region5
  $region4: #{net_forward.1} parent=0 // pred_region
    _
  $region5: #{net_forward.1} parent=0 // pred_fallthru
    _
  // Predicated region
  $region6: #{net_forward.1} parent=0 // pred_check
    _
  $region7: #{net_forward.1} parent=0 // pred_check_branch
    %15 = sbr.rel (0) target = $region9
  $region8: #{net_forward.1} parent=0 // pred_region
    _
  $region9: #{net_forward.1} parent=0 // pred_fallthru
    _
  // Predicated region
  $region10: #{net_forward.1} parent=0 // pred_check
    _
  $region11: #{net_forward.1} parent=0 // pred_check_branch
    %17 = sbr.rel (0) target = $region13
  $region12: #{net_forward.1} parent=0 // pred_region
    _
  $region13: #{net_forward.1} parent=0 // pred_fallthru
    _
  // Predicated region
  $region14: #{net_forward.1} parent=0 // pred_check
    _
  $region15: #{net_forward.1} parent=0 // pred_check_branch
    %19 = sbr.rel (0) target = $region17
  $region16: #{net_forward.1} parent=0 // pred_region
    _
  $region17: #{net_forward.1} parent=0 // pred_fallthru
    _
  // Predicated region
  $region18: #{net_forward.1} parent=0 // pred_check
    _
  $region19: #{net_forward.1} parent=0 // pred_check_branch
    %21 = sbr.rel (0) target = $region21
  $region20: #{net_forward.1} parent=0 // pred_region
    _
  $region21: #{net_forward.1} parent=0 // pred_fallthru
    _
  // Predicated region
  $region22: #{net_forward.1} parent=0 // pred_check
    _
  $region23: #{net_forward.1} parent=0 // pred_check_branch
    %23 = sbr.rel (0) target = $region25
  $region24: #{net_forward.1} parent=0 // pred_region
    _
  $region25: #{net_forward.1} parent=0 // pred_fallthru
    _
  // Predicated region
  $region26: #{net_forward.1} parent=0 // pred_check
    _
  $region27: #{net_forward.1} parent=0 // pred_check_branch
    %25 = sbr.rel (0) target = $region29
  $region28: #{net_forward.1} parent=0 // pred_region
    _
  $region29: #{net_forward.1} parent=0 // pred_fallthru
    _
  %v26 = vld [vmem:[%s0] sm:$0xff]
  %v27 = vld [vmem:[%s0 + $0x8] sm:$0xff]
  %v28 = vld [vmem:[%s0 + $0x10] sm:$0xff]
  %v29 = vld [vmem:[%s0 + $0x18] sm:$0xff]
  %v30 = vld [vmem:[%s0 + $0x20] sm:$0xff]
  %v31 = vld [vmem:[%s0 + $0x28] sm:$0xff]
  %v32 = vld [vmem:[%s0 + $0x30] sm:$0xff]
  %v33 = vld [vmem:[%s0 + $0x38] sm:$0xff]
  %v34 = vld [vmem:[%s0 + $0x40] sm:$0xff]
  %v35 = vld [vmem:[%s0 + $0x48] sm:$0xff]
  %v36 = vld [vmem:[%s0 + $0x50] sm:$0xff]
  %v37 = vld [vmem:[%s0 + $0x58] sm:$0xff]
  %v38 = vld [vmem:[%s0 + $0x60] sm:$0xff]
  %v39 = vld [vmem:[%s0 + $0x68] sm:$0xff]
  %v40 = vld [vmem:[%s0 + $0x70] sm:$0xff]
  %v41 = vld [vmem:[%s0 + $0x78] sm:$0xff]
  %v42 = vld [vmem:[%s1] sm:$0xff]
  %v43 = vld [vmem:[%s1 + $0x8] sm:$0xff]
  %v44 = vld [vmem:[%s1 + $0x10] sm:$0xff]
  %v45 = vld [vmem:[%s1 + $0x18] sm:$0xff]
  %v46 = vld [vmem:[%s1 + $0x20] sm:$0xff]
  %v47 = vld [vmem:[%s1 + $0x28] sm:$0x1f]
  %vm48 = vcmask 367616
  %v50 = vsel %vm48, %v26, 0
  %v53 = vsel %vm48, %v27, 0
  %v56 = vsel %vm48, %v28, 0
  %v59 = vsel %vm48, %v29, 0
  %v62 = vsel %vm48, %v30, 0
  %v65 = vsel %vm48, %v31, 0
  %v68 = vsel %vm48, %v32, 0
  %v71 = vsel %vm48, %v33, 0
  %v74 = vsel %vm48, %v34, 0
  %v77 = vsel %vm48, %v35, 0
  %v80 = vsel %vm48, %v36, 0
  %v83 = vsel %vm48, %v37, 0
  %v86 = vsel %vm48, %v38, 0
  %v89 = vsel %vm48, %v39, 0
  %v92 = vsel %vm48, %v40, 0
  %v95 = vsel %vm48, %v41, 0
  %vm97 = vcmask 1044480
  %v99 = vsel %vm97, %v47, 0
  %101 = vmatprep.subr.mxu0 0.0
  %102 = vmatpush1.msra.mxu0 %v42
  %103 = vmatprep.subr.mxu0 0.0
  %104 = vmatpush1.msra.mxu0 %v43
  %105 = vmatprep.subr.mxu0 0.0
  %106 = vmatpush1.msra.mxu0 %v44
  %107 = vmatprep.subr.mxu0 0.0
  %108 = vmatpush1.msra.mxu0 %v45
  %109 = vmatprep.subr.mxu0 0.0
  %110 = vmatpush1.msra.mxu0 %v46
  %111 = vmatprep.subr.mxu0 0.0
  %112 = vmatpush1.msra.mxu0 %v99
  %113 = vmatprep.subr.mxu0 0.0
  %114 = vmatpush1.msra.mxu0 0.0
  %115 = vmatprep.subr.mxu0 0.0
  %116 = vmatpush1.msra.mxu0 0.0
  %117 = vmatprep.subr.mxu0 0.0
  %118 = vmatpush1.msra.mxu0 0.0
  %119 = vmatprep.subr.mxu0 0.0
  %120 = vmatpush1.msra.mxu0 0.0
  %121 = vmatprep.subr.mxu0 0.0
  %122 = vmatpush1.msra.mxu0 0.0
  %123 = vmatprep.subr.mxu0 0.0
  %124 = vmatpush1.msra.mxu0 0.0
  %125 = vmatprep.subr.mxu0 0.0
  %126 = vmatpush1.msra.mxu0 0.0
  %127 = vmatprep.subr.mxu0 0.0
  %128 = vmatpush1.msra.mxu0 0.0
  %129 = vmatprep.subr.mxu0 0.0
  %130 = vmatpush1.msra.mxu0 0.0
  %131 = vmatprep.subr.mxu0 0.0
  %132 = vmatpush1.msra.mxu0 0.0
  %133 = vmatprep.subr.mxu0 0.0
  %134 = vmatpush1.msra.mxu0 0.0
  %135 = vmatprep.subr.mxu0 0.0
  %136 = vmatpush1.msra.mxu0 0.0
  %137 = vmatprep.subr.mxu0 0.0
  %138 = vmatpush1.msra.mxu0 0.0
  %139 = vmatprep.subr.mxu0 0.0
  %140 = vmatpush1.msra.mxu0 0.0
  %141 = vmatprep.subr.mxu0 0.0
  %142 = vmatpush1.msra.mxu0 0.0
  %143 = vmatprep.subr.mxu0 0.0
  %144 = vmatpush1.msra.mxu0 0.0
  %145 = vmatprep.subr.mxu0 0.0
  %146 = vmatpush1.msra.mxu0 0.0
  %147 = vmatprep.subr.mxu0 0.0
  %148 = vmatpush1.msra.mxu0 0.0
  %149 = vmatprep.subr.mxu0 0.0
  %150 = vmatpush1.msra.mxu0 0.0
  %151 = vmatprep.subr.mxu0 0.0
  %152 = vmatpush1.msra.mxu0 0.0
  %153 = vmatprep.subr.mxu0 0.0
  %154 = vmatpush1.msra.mxu0 0.0
  %155 = vmatprep.subr.mxu0 0.0
  %156 = vmatpush1.msra.mxu0 0.0
  %157 = vmatprep.subr.mxu0 0.0
  %158 = vmatpush1.msra.mxu0 0.0
  %159 = vmatprep.subr.mxu0 0.0
  %160 = vmatpush1.msra.mxu0 0.0
  %161 = vmatprep.subr.mxu0 0.0
  %162 = vmatpush1.msra.mxu0 0.0
  %163 = vmatprep.subr.mxu0 0.0
  %164 = vmatpush1.msra.mxu0 0.0
  %165 = vmatprep.mubr.f32.mxu0 0.0
  %166 = vmatmul.mubr.f32.gmra.mrb[0].mxu0 %v50
  %v167 = vpop.f32.mrb[0].mxu0
  %v168 = vadd.f32 0.0, %v167
  %v169 = vpop.f32.mrb[0].mxu0
  %170 = vmatprep.mubr.f32.mxu0 0.0
  %171 = vmatmul.mubr.f32.gmra.mrb[0].mxu0 %v53
  %v172 = vpop.f32.mrb[0].mxu0
  %v173 = vadd.f32 0.0, %v172
  %v174 = vpop.f32.mrb[0].mxu0
  %175 = vmatprep.mubr.f32.mxu0 0.0
  %176 = vmatmul.mubr.f32.gmra.mrb[0].mxu0 %v56
  %v177 = vpop.f32.mrb[0].mxu0
  %v178 = vadd.f32 0.0, %v177
  %v179 = vpop.f32.mrb[0].mxu0
  %180 = vmatprep.mubr.f32.mxu0 0.0
  %181 = vmatmul.mubr.f32.gmra.mrb[0].mxu0 %v59
  %v182 = vpop.f32.mrb[0].mxu0
  %v183 = vadd.f32 0.0, %v182
  %v184 = vpop.f32.mrb[0].mxu0
  %185 = vmatprep.mubr.f32.mxu0 0.0
  %186 = vmatmul.mubr.f32.gmra.mrb[0].mxu0 %v62
  %v187 = vpop.f32.mrb[0].mxu0
  %v188 = vadd.f32 0.0, %v187
  %v189 = vpop.f32.mrb[0].mxu0
  %190 = vmatprep.mubr.f32.mxu0 0.0
  %191 = vmatmul.mubr.f32.gmra.mrb[0].mxu0 %v65
  %v192 = vpop.f32.mrb[0].mxu0
  %v193 = vadd.f32 0.0, %v192
  %v194 = vpop.f32.mrb[0].mxu0
  %195 = vmatprep.mubr.f32.mxu0 0.0
  %196 = vmatmul.mubr.f32.gmra.mrb[0].mxu0 %v68
  %v197 = vpop.f32.mrb[0].mxu0
  %v198 = vadd.f32 0.0, %v197
  %v199 = vpop.f32.mrb[0].mxu0
  %200 = vmatprep.mubr.f32.mxu0 0.0
  %201 = vmatmul.mubr.f32.gmra.mrb[0].mxu0 %v71
  %v202 = vpop.f32.mrb[0].mxu0
  %v203 = vadd.f32 0.0, %v202
  %v204 = vpop.f32.mrb[0].mxu0
  %205 = vmatprep.mubr.f32.mxu0 0.0
  %206 = vmatmul.mubr.f32.gmra.mrb[0].mxu0 %v74
  %v207 = vpop.f32.mrb[0].mxu0
  %v208 = vadd.f32 0.0, %v207
  %v209 = vpop.f32.mrb[0].mxu0
  %210 = vmatprep.mubr.f32.mxu0 0.0
  %211 = vmatmul.mubr.f32.gmra.mrb[0].mxu0 %v77
  %v212 = vpop.f32.mrb[0].mxu0
  %v213 = vadd.f32 0.0, %v212
  %v214 = vpop.f32.mrb[0].mxu0
  %215 = vmatprep.mubr.f32.mxu0 0.0
  %216 = vmatmul.mubr.f32.gmra.mrb[0].mxu0 %v80
  %v217 = vpop.f32.mrb[0].mxu0
  %v218 = vadd.f32 0.0, %v217
  %v219 = vpop.f32.mrb[0].mxu0
  %220 = vmatprep.mubr.f32.mxu0 0.0
  %221 = vmatmul.mubr.f32.gmra.mrb[0].mxu0 %v83
  %v222 = vpop.f32.mrb[0].mxu0
  %v223 = vadd.f32 0.0, %v222
  %v224 = vpop.f32.mrb[0].mxu0
  %225 = vmatprep.mubr.f32.mxu0 0.0
  %226 = vmatmul.mubr.f32.gmra.mrb[0].mxu0 %v86
  %v227 = vpop.f32.mrb[0].mxu0
  %v228 = vadd.f32 0.0, %v227
  %v229 = vpop.f32.mrb[0].mxu0
  %230 = vmatprep.mubr.f32.mxu0 0.0
  %231 = vmatmul.mubr.f32.gmra.mrb[0].mxu0 %v89
  %v232 = vpop.f32.mrb[0].mxu0
  %v233 = vadd.f32 0.0, %v232
  %v234 = vpop.f32.mrb[0].mxu0
  %235 = vmatprep.mubr.f32.mxu0 0.0
  %236 = vmatmul.mubr.f32.gmra.mrb[0].mxu0 %v92
  %v237 = vpop.f32.mrb[0].mxu0
  %v238 = vadd.f32 0.0, %v237
  %v239 = vpop.f32.mrb[0].mxu0
  %240 = vmatprep.mubr.f32.mxu0 0.0
  %241 = vmatmul.mubr.f32.gmra.mrb[0].mxu0 %v95
  %v242 = vpop.f32.mrb[0].mxu0
  %v243 = vadd.f32 0.0, %v242
  %v244 = vpop.f32.mrb[0].mxu0
  %245 = vdwg.mxu0
  %246 = vxpose.xlu0.b32.start [1/16] %v168, 128
  %247 = vxpose.xlu0.b32.cont [2/16] %v173, 128
  %248 = vxpose.xlu0.b32.cont [3/16] %v178, 128
  %249 = vxpose.xlu0.b32.cont [4/16] %v183, 128
  %250 = vxpose.xlu0.b32.cont [5/16] %v188, 128
  %251 = vxpose.xlu0.b32.cont [6/16] %v193, 128
  %252 = vxpose.xlu0.b32.cont [7/16] %v198, 128
  %253 = vxpose.xlu0.b32.cont [8/16] %v203, 128
  %254 = vxpose.xlu0.b32.cont [9/16] %v208, 128
  %255 = vxpose.xlu0.b32.cont [10/16] %v213, 128
  %256 = vxpose.xlu0.b32.cont [11/16] %v218, 128
  %257 = vxpose.xlu0.b32.cont [12/16] %v223, 128
  %258 = vxpose.xlu0.b32.cont [13/16] %v228, 128
  %259 = vxpose.xlu0.b32.cont [14/16] %v233, 128
  %260 = vxpose.xlu0.b32.cont [15/16] %v238, 128
  %261 = vxpose.xlu0.b32.end [16/16] %v243, 128
  %v262 = vpop.trf.xlu0
  %v263 = vpop.trf.xlu0
  %v264 = vpop.trf.xlu0
  %v265 = vpop.trf.xlu0
  %v266 = vpop.trf.xlu0
  %v267 = vpop.trf.xlu0
  %v268 = vpop.trf.xlu0
  %v269 = vpop.trf.xlu0
  %v270 = vpop.trf.xlu0
  %v271 = vpop.trf.xlu0
  %v272 = vpop.trf.xlu0
  %v273 = vpop.trf.xlu0
  %v274 = vpop.trf.xlu0
  %v275 = vpop.trf.xlu0
  %v276 = vpop.trf.xlu0
  %v277 = vpop.trf.xlu0
  %v278 = vld [vmem:[%s2] sm:$0xff]
  %v279 = vld [vmem:[%s2 + $0x8] sm:$0xff]
  %v280 = vld [vmem:[%s2 + $0x10] sm:$0xf]
  %282 = vset.pattern.permute.xlu0 0
  %283 = vperm.xlu0 %282, %v278
  %v284 = vpop.permute.xlu0 %283
  %287 = vset.pattern.permute.xlu0 0
  %288 = vperm.xlu0 %287, %v279
  %v289 = vpop.permute.xlu0 %288
  %292 = vset.pattern.permute.xlu0 0
  %293 = vperm.xlu0 %292, %v280
  %v294 = vpop.permute.xlu0 %293
  %v296 = vadd.f32 %v262, %v284
  %v297 = vadd.f32 %v263, %v289
  %v298 = vadd.f32 %v264, %v294
  %v299 = vmax.f32 %v296, 0.0
  %v300 = vmax.f32 %v297, 0.0
  %v301 = vmax.f32 %v298, 0.0
  %v302 = vld [vmem:[%s3] sm:$0xff]
  %v303 = vld [vmem:[%s3 + $0x8] sm:$0x3]
  %v304 = vld [vmem:[%s4] sm:$0xff]
  %v305 = vld [vmem:[%s4 + $0x8] sm:$0x3]
  %307 = vset.pattern.permute.xlu0 0
  %308 = vperm.xlu0 %307, %v304
  %v309 = vpop.permute.xlu0 %308
  %312 = vset.pattern.permute.xlu0 0
  %313 = vperm.xlu0 %312, %v305
  %v314 = vpop.permute.xlu0 %313
  %vm316 = vcmask 162816
  %v318 = vsel %vm316, %v302, 0
  %v321 = vsel %vm316, %v303, 0
  %vm323 = vcmask 1043456
  %v325 = vsel %vm323, %v301, 0
  %327 = vmatprep.subr.mxu0 0.0
  %328 = vmatpush1.msra.mxu0 %v299
  %329 = vmatprep.subr.mxu0 0.0
  %330 = vmatpush1.msra.mxu0 %v300
  %331 = vmatprep.subr.mxu0 0.0
  %332 = vmatpush1.msra.mxu0 %v325
  %333 = vmatprep.subr.mxu0 0.0
  %334 = vmatpush1.msra.mxu0 0.0
  %335 = vmatprep.subr.mxu0 0.0
  %336 = vmatpush1.msra.mxu0 0.0
  %337 = vmatprep.subr.mxu0 0.0
  %338 = vmatpush1.msra.mxu0 0.0
  %339 = vmatprep.subr.mxu0 0.0
  %340 = vmatpush1.msra.mxu0 0.0
  %341 = vmatprep.subr.mxu0 0.0
  %342 = vmatpush1.msra.mxu0 0.0
  %343 = vmatprep.subr.mxu0 0.0
  %344 = vmatpush1.msra.mxu0 0.0
  %345 = vmatprep.subr.mxu0 0.0
  %346 = vmatpush1.msra.mxu0 0.0
  %347 = vmatprep.subr.mxu0 0.0
  %348 = vmatpush1.msra.mxu0 0.0
  %349 = vmatprep.subr.mxu0 0.0
  %350 = vmatpush1.msra.mxu0 0.0
  %351 = vmatprep.subr.mxu0 0.0
  %352 = vmatpush1.msra.mxu0 0.0
  %353 = vmatprep.subr.mxu0 0.0
  %354 = vmatpush1.msra.mxu0 0.0
  %355 = vmatprep.subr.mxu0 0.0
  %356 = vmatpush1.msra.mxu0 0.0
  %357 = vmatprep.subr.mxu0 0.0
  %358 = vmatpush1.msra.mxu0 0.0
  %359 = vmatprep.subr.mxu0 0.0
  %360 = vmatpush1.msra.mxu0 0.0
  %361 = vmatprep.subr.mxu0 0.0
  %362 = vmatpush1.msra.mxu0 0.0
  %363 = vmatprep.subr.mxu0 0.0
  %364 = vmatpush1.msra.mxu0 0.0
  %365 = vmatprep.subr.mxu0 0.0
  %366 = vmatpush1.msra.mxu0 0.0
  %367 = vmatprep.subr.mxu0 0.0
  %368 = vmatpush1.msra.mxu0 0.0
  %369 = vmatprep.subr.mxu0 0.0
  %370 = vmatpush1.msra.mxu0 0.0
  %371 = vmatprep.subr.mxu0 0.0
  %372 = vmatpush1.msra.mxu0 0.0
  %373 = vmatprep.subr.mxu0 0.0
  %374 = vmatpush1.msra.mxu0 0.0
  %375 = vmatprep.subr.mxu0 0.0
  %376 = vmatpush1.msra.mxu0 0.0
  %377 = vmatprep.subr.mxu0 0.0
  %378 = vmatpush1.msra.mxu0 0.0
  %379 = vmatprep.subr.mxu0 0.0
  %380 = vmatpush1.msra.mxu0 0.0
  %381 = vmatprep.subr.mxu0 0.0
  %382 = vmatpush1.msra.mxu0 0.0
  %383 = vmatprep.subr.mxu0 0.0
  %384 = vmatpush1.msra.mxu0 0.0
  %385 = vmatprep.subr.mxu0 0.0
  %386 = vmatpush1.msra.mxu0 0.0
  %387 = vmatprep.subr.mxu0 0.0
  %388 = vmatpush1.msra.mxu0 0.0
  %389 = vmatprep.subr.mxu0 0.0
  %390 = vmatpush1.msra.mxu0 0.0
  %391 = vmatprep.mubr.f32.mxu0 0.0
  %392 = vmatmul.mubr.f32.gmra.mrb[0].mxu0 %v318
  %v393 = vpop.f32.mrb[0].mxu0
  %v394 = vadd.f32 %v309, %v393
  %v395 = vpop.f32.mrb[0].mxu0
  %396 = vmatprep.mubr.f32.mxu0 0.0
  %397 = vmatmul.mubr.f32.gmra.mrb[0].mxu0 %v321
  %v398 = vpop.f32.mrb[0].mxu0
  %v399 = vadd.f32 %v314, %v398
  %v400 = vpop.f32.mrb[0].mxu0
  %401 = vdwg.mxu0
  %v402 = vmax.f32 %v394, 0.0
  %v403 = vmax.f32 %v399, 0.0
  %v404 = vld [vmem:[%s5] sm:$0x1f]
  %v405 = vld [vmem:[%s6] sm:$0x1f]
  %407 = vset.pattern.permute.xlu0 0
  %408 = vperm.xlu0 %407, %v405
  %v409 = vpop.permute.xlu0 %408
  %vm411 = vcmask 80896
  %v413 = vsel %vm411, %v404, 0
  %vm415 = vcmask 1041408
  %v417 = vsel %vm415, %v403, 0
  %419 = vmatprep.subr.mxu0 0.0
  %420 = vmatpush1.msra.mxu0 %v402
  %421 = vmatprep.subr.mxu0 0.0
  %422 = vmatpush1.msra.mxu0 %v417
  %423 = vmatprep.subr.mxu0 0.0
  %424 = vmatpush1.msra.mxu0 0.0
  %425 = vmatprep.subr.mxu0 0.0
  %426 = vmatpush1.msra.mxu0 0.0
  %427 = vmatprep.subr.mxu0 0.0
  %428 = vmatpush1.msra.mxu0 0.0
  %429 = vmatprep.subr.mxu0 0.0
  %430 = vmatpush1.msra.mxu0 0.0
  %431 = vmatprep.subr.mxu0 0.0
  %432 = vmatpush1.msra.mxu0 0.0
  %433 = vmatprep.subr.mxu0 0.0
  %434 = vmatpush1.msra.mxu0 0.0
  %435 = vmatprep.subr.mxu0 0.0
  %436 = vmatpush1.msra.mxu0 0.0
  %437 = vmatprep.subr.mxu0 0.0
  %438 = vmatpush1.msra.mxu0 0.0
  %439 = vmatprep.subr.mxu0 0.0
  %440 = vmatpush1.msra.mxu0 0.0
  %441 = vmatprep.subr.mxu0 0.0
  %442 = vmatpush1.msra.mxu0 0.0
  %443 = vmatprep.subr.mxu0 0.0
  %444 = vmatpush1.msra.mxu0 0.0
  %445 = vmatprep.subr.mxu0 0.0
  %446 = vmatpush1.msra.mxu0 0.0
  %447 = vmatprep.subr.mxu0 0.0
  %448 = vmatpush1.msra.mxu0 0.0
  %449 = vmatprep.subr.mxu0 0.0
  %450 = vmatpush1.msra.mxu0 0.0
  %451 = vmatprep.subr.mxu0 0.0
  %452 = vmatpush1.msra.mxu0 0.0
  %453 = vmatprep.subr.mxu0 0.0
  %454 = vmatpush1.msra.mxu0 0.0
  %455 = vmatprep.subr.mxu0 0.0
  %456 = vmatpush1.msra.mxu0 0.0
  %457 = vmatprep.subr.mxu0 0.0
  %458 = vmatpush1.msra.mxu0 0.0
  %459 = vmatprep.subr.mxu0 0.0
  %460 = vmatpush1.msra.mxu0 0.0
  %461 = vmatprep.subr.mxu0 0.0
  %462 = vmatpush1.msra.mxu0 0.0
  %463 = vmatprep.subr.mxu0 0.0
  %464 = vmatpush1.msra.mxu0 0.0
  %465 = vmatprep.subr.mxu0 0.0
  %466 = vmatpush1.msra.mxu0 0.0
  %467 = vmatprep.subr.mxu0 0.0
  %468 = vmatpush1.msra.mxu0 0.0
  %469 = vmatprep.subr.mxu0 0.0
  %470 = vmatpush1.msra.mxu0 0.0
  %471 = vmatprep.subr.mxu0 0.0
  %472 = vmatpush1.msra.mxu0 0.0
  %473 = vmatprep.subr.mxu0 0.0
  %474 = vmatpush1.msra.mxu0 0.0
  %475 = vmatprep.subr.mxu0 0.0
  %476 = vmatpush1.msra.mxu0 0.0
  %477 = vmatprep.subr.mxu0 0.0
  %478 = vmatpush1.msra.mxu0 0.0
  %479 = vmatprep.subr.mxu0 0.0
  %480 = vmatpush1.msra.mxu0 0.0
  %481 = vmatprep.subr.mxu0 0.0
  %482 = vmatpush1.msra.mxu0 0.0
  %483 = vmatprep.mubr.f32.mxu0 0.0
  %484 = vmatmul.mubr.f32.gmra.mrb[0].mxu0 %v413
  %v485 = vpop.f32.mrb[0].mxu0
  %v486 = vadd.f32 %v409, %v485
  %v487 = vpop.f32.mrb[0].mxu0
  %488 = vdwg.mxu0
  %v489 = vsel %vm97, %v486, -inf
  %v490 = vrot.slane %v489, 4
  %v491 = vmax.f32 %v489, %v490
  %v492 = vrot.slane %v491, 2
  %v493 = vmax.f32 %v491, %v492
  %v494 = vrot.slane %v493, 1
  %v495 = vmax.f32 %v493, %v494
  %v496 = vsub.f32 %v486, %v495
  %v497 = vmul.f32 %v496, 1.442695
  %v498 = vpow.pop %v497
  %v499 = vsel %vm97, %v498, 0.0
  %v500 = vrot.slane %v499, 4
  %v501 = vadd.f32 %v499, %v500
  %v502 = vrot.slane %v501, 2
  %v503 = vadd.f32 %v501, %v502
  %v504 = vrot.slane %v503, 1
  %v505 = vadd.f32 %v503, %v504
  %v506 = vrcp.pop %v505
  %v507 = vmul.f32 %v498, %v506
  %508 = vst [vmem:[%s7] sm:$0x1f] %v507
  // Predicated region
  $region30: #{net_forward.1} parent=0 // pred_check
    _
  $region31: #{net_forward.1} parent=0 // pred_check_branch
    %510 = sbr.rel (0) target = $region33
  $region32: #{net_forward.1} parent=0 // pred_region
    _
  $region33: #{net_forward.1} parent=0 // pred_fallthru
    _
  // Predicated region
  $region34: #{net_forward.1} parent=0 // pred_check
    _
  $region35: #{net_forward.1} parent=0 // pred_check_branch
    %512 = sbr.rel (0) target = $region37
  $region36: #{net_forward.1} parent=0 // pred_region
    _
  $region37: #{net_forward.1} parent=0 // pred_fallthru
    _

</llo_original>
